<compile_context>
chip_gen: v7x
topology: tpu7x:2x2x1
jax: 0.10.0
libtpu: 0.0.40
codegen_flags: <defaults>
</compile_context>

<pallas_src>
import math

import jax
import jax.numpy as jnp
from jax.experimental import pallas as pl
from jax.experimental.pallas import tpu as pltpu


def _round_up(n, m):
    return ((n + m - 1) // m) * m


def _mlp_error_kernel(x_ref, pcol_ref, w2t_ref, bh_ref, o_ref):
    """Batch-on-lanes MLP forward.

    x_ref    : (1, TB)   batch packed densely along lanes
    pcol_ref : (Hp, 4)   param columns [w1 | b1 | b2 | wh], zero-padded rows
    w2t_ref  : (Hp, Hp)  layer-2 weight, transposed + zero-padded
    bh_ref   : (1,)      head bias scalar in SMEM
    o_ref    : (1, TB)
    """
    x = x_ref[...]                       # (1, TB) lane-dense batch
    w1 = pcol_ref[:, 0:1]                # (Hp, 1)
    b1 = pcol_ref[:, 1:2]
    b2 = pcol_ref[:, 2:3]
    wh = pcol_ref[:, 3:4]

    # Layer 0 (in_features == 1): pure VPU broadcast FMA at full lane density.
    h1 = jnp.maximum(w1 * x + b1, 0.0)                                   # (Hp, TB)

    # Layer 1: MXU matmul with the lane-dense batch as N (N = TB, large).
    h2 = jnp.dot(w2t_ref[...], h1, preferred_element_type=jnp.float32) + b2
    h2 = jnp.maximum(h2, 0.0)                                            # (Hp, TB)

    # Head (out_features == 1): elementwise multiply + sublane (XLU) reduce;
    # scalar bias comes from SMEM.
    out = jnp.sum(h2 * wh, axis=0, keepdims=True) + bh_ref[0]            # (1, TB)
    o_ref[...] = out.astype(o_ref.dtype)


def prepare_params(params):
    """One-time host-side packing (hoisted out of the per-call path).

    Builds:
      pcols : (Hp, 4) column slab  [w1 | b1 | b2 | wh], Hp = max(H1,H2) rounded to 8
      w2t   : (Hp, Hp) zero-padded transpose of w2
      bh    : (1,) scalar head bias for SMEM
    Zero padding is inert: padded h1 rows are relu(0)=0, padded w2t rows/cols and
    padded wh entries contribute nothing.
    """
    w1, b1, w2, b2, wh, bh = (params["w1"], params["b1"], params["w2"],
                              params["b2"], params["wh"], params["bh"])
    h1_dim, h2_dim = w2.shape
    hp = _round_up(max(h1_dim, h2_dim), 8)

    def col(a, h):
        return jnp.pad(a.reshape(h, 1), ((0, hp - h), (0, 0)))

    pcols = jnp.concatenate(
        [col(w1, h1_dim), col(b1, h1_dim), col(b2, h2_dim), col(wh, h2_dim)],
        axis=1,
    ).astype(jnp.float32)                                                 # (hp, 4)
    w2t = jnp.pad(
        w2.T, ((0, hp - h2_dim), (0, hp - h1_dim))
    ).astype(jnp.float32)                                                 # (hp, hp)
    bh_flat = bh.reshape(-1).astype(jnp.float32)                          # (1,)

    return {"pcols": pcols, "w2t": w2t, "bh": bh_flat,
            "h1": h1_dim, "h2": h2_dim, "hp": hp}


def model_error_forward(x, prepped, *, block_b=8192):
    """Forward pass of ModelError(num_hidden=(H1, H2)).

    x       : (B, 1) float32.
    prepped : output of prepare_params().
    block_b : batch-lane tile size (rounded up to a multiple of 128).
    """
    pcols, w2t, bh = prepped["pcols"], prepped["w2t"], prepped["bh"]
    h1_dim, h2_dim, hp = prepped["h1"], prepped["h2"], prepped["hp"]

    B = x.shape[0]

    # Lane-dense batch layout: (B, 1) -> (1, B_pad), tiles of (1, TB), TB % 128 == 0.
    tb = min(_round_up(block_b, 128), _round_up(B, 128))
    b_pad = _round_up(B, tb)

    x_flat = x.reshape(-1).astype(jnp.float32)
    if b_pad != B:
        # Only pads when B is ragged w.r.t. the tile; padded lanes are sliced off.
        x_flat = jnp.pad(x_flat, (0, b_pad - B))
    x_lanes = x_flat.reshape(1, b_pad)

    grid = (b_pad // tb,)

    cost = pl.CostEstimate(
        flops=2 * b_pad * (h1_dim + h1_dim * h2_dim + h2_dim),
        transcendentals=0,
        bytes_accessed=4 * (2 * b_pad + 4 * hp + hp * hp + 1),
    )

    out = pl.pallas_call(
        _mlp_error_kernel,
        out_shape=jax.ShapeDtypeStruct((1, b_pad), jnp.float32),
        grid=grid,
        in_specs=[
            pl.BlockSpec((1, tb), lambda i: (0, i)),             # x: lane-dense tile
            pl.BlockSpec((hp, 4), lambda i: (0, 0)),             # param columns: resident
            pl.BlockSpec((hp, hp), lambda i: (0, 0)),            # w2^T: resident
            pl.BlockSpec(memory_space=pltpu.MemorySpace.SMEM),   # bh: scalar in SMEM
        ],
        out_specs=pl.BlockSpec((1, tb), lambda i: (0, i)),
        compiler_params=pltpu.CompilerParams(
            # NOTE: on v7x, CORE_PARALLEL (or pl.core_map) is the lever for real
            # 2-TC sharding of the batch grid; plain "parallel" is safe everywhere.
            dimension_semantics=("parallel",),
            vmem_limit_bytes=32 * 1024 * 1024,
        ),
        cost_estimate=cost,
    )(x_lanes, pcols, w2t, bh)

    return out[0, :B].reshape(B, 1)


# ----------------------------- init & reference ------------------------------

def _xavier_uniform(key, fan_in, fan_out, shape):
    # Matches torch.nn.init.xavier_uniform_ with gain=1.0.
    bound = math.sqrt(6.0 / (fan_in + fan_out))
    return jax.random.uniform(key, shape, jnp.float32, -bound, bound)


def _torch_linear_bias(key, fan_in, shape):
    # Matches PyTorch nn.Linear default bias init: U(-1/sqrt(fan_in), 1/sqrt(fan_in)).
    bound = 1.0 / math.sqrt(fan_in)
    return jax.random.uniform(key, shape, jnp.float32, -bound, bound)


def init_params(key, num_hidden):
    # num_hidden = (H1, H2); arch: Linear(1,H1)+ReLU, Linear(H1,H2)+ReLU, Linear(H2,1)
    h1, h2 = num_hidden
    k = jax.random.split(key, 6)
    return {
        # stored as [in, out] (transposed relative to PyTorch's [out, in])
        "w1": _xavier_uniform(k[0], 1, h1, (1, h1)),
        "b1": _torch_linear_bias(k[1], 1, (1, h1)),
        "w2": _xavier_uniform(k[2], h1, h2, (h1, h2)),
        "b2": _torch_linear_bias(k[3], h1, (1, h2)),
        "wh": _xavier_uniform(k[4], h2, 1, (1, h2)),   # head weight kept as (1, H2)
        "bh": _torch_linear_bias(k[5], h2, (1, 1)),
    }


def reference_forward(x, params):
    h1 = jnp.maximum(x @ params["w1"] + params["b1"], 0.0)
    h2 = jnp.maximum(h1 @ params["w2"] + params["b2"], 0.0)
    return h2 @ params["wh"].T + params["bh"]


if __name__ == "__main__":
    key = jax.random.PRNGKey(0)
    k_param, k_x_small, k_x_big = jax.random.split(key, 3)

    num_hidden = (32, 32)
    params = init_params(k_param, num_hidden)
    prepped = prepare_params(params)   # packed once, outside the forward path

    # Small deterministic example (primary check).
    batch = 8
    x = jax.random.normal(k_x_small, (batch, 1), jnp.float32)
    out = jax.block_until_ready(model_error_forward(x, prepped))
    ref = reference_forward(x, params)
    assert out.shape == (batch, 1)
    assert jnp.allclose(out, ref, atol=1e-5, rtol=1e-5), "mismatch vs pure-JAX reference (small)"

    # Larger ragged batch to exercise multi-tile grid + tail padding.
    batch_big = 4101
    x_big = jax.random.normal(k_x_big, (batch_big, 1), jnp.float32)
    out_big = jax.block_until_ready(model_error_forward(x_big, prepped, block_b=1024))
    ref_big = reference_forward(x_big, params)
    assert out_big.shape == (batch_big, 1)
    assert jnp.allclose(out_big, ref_big, atol=1e-5, rtol=1e-5), "mismatch vs pure-JAX reference (big)"

    print("KERNEL_OK")
</pallas_src>

<mosaic_0001>
module attributes {stable_mosaic.version = 11 : i64} {
  func.func @_mlp_error_kernel(%arg0: i32, %arg1: memref<1x128xf32, #tpu.memory_space<vmem>>, %arg2: memref<32x4xf32, #tpu.memory_space<vmem>>, %arg3: memref<32x32xf32, #tpu.memory_space<vmem>>, %arg4: memref<1xf32, #tpu.memory_space<smem>>, %arg5: memref<1x128xf32, #tpu.memory_space<vmem>>) attributes {dimension_semantics = [#tpu.dimension_semantics<parallel>], iteration_bounds = array<i64: 1>, scalar_prefetch = 0 : i64, scratch_operands = 0 : i64, tpu.core_type = #tpu.core_type<tc>, window_params = [{transform_indices = @transform_0, window_bounds = array<i64: 1, 128>}, {pipeline_mode = #tpu.pipeline_mode<synchronous>, transform_indices = @transform_1, window_bounds = array<i64: 32, 4>}, {pipeline_mode = #tpu.pipeline_mode<synchronous>, transform_indices = @transform_2, window_bounds = array<i64: 32, 32>}, {transform_indices = @transform_3, window_bounds = array<i64: 1>}, {transform_indices = @transform_4, window_bounds = array<i64: 1, 128>}]} {
    %c0 = arith.constant 0 : index
    %c0_0 = arith.constant 0 : index
    %0 = vector.load %arg1[%c0, %c0_0] : memref<1x128xf32, #tpu.memory_space<vmem>>, vector<1x128xf32>
    %c0_1 = arith.constant 0 : index
    %c0_2 = arith.constant 0 : index
    %1 = vector.load %arg2[%c0_1, %c0_2] : memref<32x4xf32, #tpu.memory_space<vmem>>, vector<32x1xf32>
    %c0_3 = arith.constant 0 : index
    %c1 = arith.constant 1 : index
    %2 = vector.load %arg2[%c0_3, %c1] : memref<32x4xf32, #tpu.memory_space<vmem>>, vector<32x1xf32>
    %c0_4 = arith.constant 0 : index
    %c2 = arith.constant 2 : index
    %3 = vector.load %arg2[%c0_4, %c2] : memref<32x4xf32, #tpu.memory_space<vmem>>, vector<32x1xf32>
    %c0_5 = arith.constant 0 : index
    %c3 = arith.constant 3 : index
    %4 = vector.load %arg2[%c0_5, %c3] : memref<32x4xf32, #tpu.memory_space<vmem>>, vector<32x1xf32>
    %5 = vector.broadcast %1 : vector<32x1xf32> to vector<32x128xf32>
    %6 = vector.broadcast %0 : vector<1x128xf32> to vector<32x128xf32>
    %7 = arith.mulf %5, %6 : vector<32x128xf32>
    %8 = vector.broadcast %2 : vector<32x1xf32> to vector<32x128xf32>
    %9 = arith.addf %7, %8 : vector<32x128xf32>
    %cst = arith.constant 0.000000e+00 : f32
    %10 = vector.broadcast %cst : f32 to vector<32x128xf32>
    %11 = arith.maximumf %9, %10 : vector<32x128xf32>
    %c0_6 = arith.constant 0 : index
    %c0_7 = arith.constant 0 : index
    %12 = vector.load %arg3[%c0_6, %c0_7] : memref<32x32xf32, #tpu.memory_space<vmem>>, vector<32x32xf32>
    %cst_8 = arith.constant dense<0.000000e+00> : vector<32x128xf32>
    %13 = tpu.matmul %12, %11, %cst_8 {dimension_numbers = #tpu.dot_dimension_numbers<[1], [0], [0], [1], [0, 0, 1, 1], [], []>} : vector<32x32xf32>, vector<32x128xf32>, vector<32x128xf32> -> vector<32x128xf32>
    %14 = vector.broadcast %3 : vector<32x1xf32> to vector<32x128xf32>
    %15 = arith.addf %13, %14 : vector<32x128xf32>
    %cst_9 = arith.constant 0.000000e+00 : f32
    %16 = vector.broadcast %cst_9 : f32 to vector<32x128xf32>
    %17 = arith.maximumf %15, %16 : vector<32x128xf32>
    %18 = vector.broadcast %4 : vector<32x1xf32> to vector<32x128xf32>
    %19 = arith.mulf %17, %18 : vector<32x128xf32>
    %cst_10 = arith.constant dense<0.000000e+00> : vector<128xf32>
    %20 = vector.multi_reduction <add>, %19, %cst_10 [0] : vector<32x128xf32> to vector<128xf32>
    %21 = vector.shape_cast %20 : vector<128xf32> to vector<1x128xf32>
    %c0_11 = arith.constant 0 : index
    %22 = memref.load %arg4[%c0_11] : memref<1xf32, #tpu.memory_space<smem>>
    %23 = vector.broadcast %22 : f32 to vector<1x128xf32>
    %24 = arith.addf %21, %23 : vector<1x128xf32>
    %c0_12 = arith.constant 0 : index
    %c0_13 = arith.constant 0 : index
    %25 = vector.load %arg5[%c0_12, %c0_13] : memref<1x128xf32, #tpu.memory_space<vmem>>, vector<1x128xf32>
    tpu.vector_store %arg5[%c0_12, %c0_13], %24 {strides = array<i32>} : memref<1x128xf32, #tpu.memory_space<vmem>>, vector<1x128xf32>,
    return
  }
  func.func @transform_0(%arg0: i32) -> (i32, i32) {
    %c0_i32 = arith.constant 0 : i32
    %c0_i32_0 = arith.constant 0 : i32
    return %c0_i32, %arg0 : i32, i32
  }
  func.func @transform_1(%arg0: i32) -> (i32, i32) {
    %c0_i32 = arith.constant 0 : i32
    %c0_i32_0 = arith.constant 0 : i32
    %c0_i32_1 = arith.constant 0 : i32
    return %c0_i32, %c0_i32_0 : i32, i32
  }
  func.func @transform_2(%arg0: i32) -> (i32, i32) {
    %c0_i32 = arith.constant 0 : i32
    %c0_i32_0 = arith.constant 0 : i32
    %c0_i32_1 = arith.constant 0 : i32
    return %c0_i32, %c0_i32_0 : i32, i32
  }
  func.func @transform_3(%arg0: i32) -> i32 {
    %c0_i32 = arith.constant 0 : i32
    %c0_i32_0 = arith.constant 0 : i32
    return %c0_i32 : i32
  }
  func.func @transform_4(%arg0: i32) -> (i32, i32) {
    %c0_i32 = arith.constant 0 : i32
    %c0_i32_0 = arith.constant 0 : i32
    return %c0_i32, %arg0 : i32, i32
  }
}

</mosaic_0001>

<llo_original>
// kernel: tpu_custom_call.1
$region0: #{tpu_custom_call.1}
  #allocation0 [shape = 'u32[]', space=smem, size = 0x4, offset = 0x4, fixed_abs, tag = 'smem constant byte address 0x4 - core index']
  #allocation1 [shape = 'u32[144,128]{1,0:T(1,128)}', space=vmem, size = 0x12000, scoped, tag = 'internal scratch']
  #allocation2 [shape = 'f32[1]{0:T(128)S(6)}', space=smem, size = 0x200, scoped, tag = 'scoped memory for tpu_custom_call.1']
  %s0 = inlined_call_operand.vmem [shape: f32[1,128], index: 0, kind: input, shape index: {}]
  %s1 = inlined_call_operand.vmem [shape: f32[32,4], index: 1, kind: input, shape index: {}]
  %s2 = inlined_call_operand.vmem [shape: f32[32,32], index: 2, kind: input, shape index: {}]
  %s3 = inlined_call_operand.<no memory space> [shape: f32[1], index: 3, kind: input, shape index: {}]
  %s4 = inlined_call_operand.hbm [shape: f32[1,128], index: 4, kind: output, shape index: {}]
  %s5 = sld [smem:[#allocation0]]
  $region26: #{tpu_custom_call.1} parent=0
    _
  %s7 = ssub.s32 1, %s5
  %s8 = scalar_select 0, %s7, %s5
  %9 = sst [smem:[#allocation2]] %s3
  $region1: #{tpu_custom_call.1} parent=0
    #allocation3 [shape = 'u8[512]{0}', space=vmem, size = 0x400, scoped, tag = 'output window, operand 0, single buffered']
    #allocation4 [shape = 's32[1]{0}', space=sflag, size = 0x4, scoped, tag = 'scoped memory for tpu_custom_call.1']
    %10 = vsyncpa [#allocation4], 0
    // Predicated region
    $region2: #{tpu_custom_call.1} parent=1 // pred_check
      _
    $region3: #{tpu_custom_call.1} parent=1 // pred_check_branch
      %12 = sbr.rel (0) target = $region5
    $region4: #{tpu_custom_call.1} parent=1 // pred_region
      _
    $region5: #{tpu_custom_call.1} parent=1 // pred_fallthru
      _
    // Predicated region
    $region6: #{tpu_custom_call.1} parent=1 // pred_check
      _
    $region7: #{tpu_custom_call.1} parent=1 // pred_check_branch
      %14 = sbr.rel (0) target = $region9
    $region8: #{tpu_custom_call.1} parent=1 // pred_region
      _
    $region9: #{tpu_custom_call.1} parent=1 // pred_fallthru
      _
    // Predicated region
    $region10: #{tpu_custom_call.1} parent=1 // pred_check
      _
    $region11: #{tpu_custom_call.1} parent=1 // pred_check_branch
      %16 = sbr.rel (0) target = $region13
    $region12: #{tpu_custom_call.1} parent=1 // pred_region
      _
    $region13: #{tpu_custom_call.1} parent=1 // pred_fallthru
      _
    // Predicated region
    $region14: #{tpu_custom_call.1} parent=1 // pred_check
      _
    $region15: #{tpu_custom_call.1} parent=1 // pred_check_branch
      %18 = sbr.rel (0) target = $region17
    $region16: #{tpu_custom_call.1} parent=1 // pred_region
      _
    $region17: #{tpu_custom_call.1} parent=1 // pred_fallthru
      _
    %v19 = vld [vmem:[%s0] sm:$0x1]
    %v20 = vld [vmem:[%s1] sm:$0xff]
    %v21 = vld [vmem:[%s1 + $0x8] sm:$0xff]
    %v22 = vld [vmem:[%s1 + $0x10] sm:$0xff]
    %v23 = vld [vmem:[%s1 + $0x18] sm:$0xff]
    %25 = vset.pattern.permute.xlu0 0
    %26 = vperm.xlu0 %25, %v20
    %v27 = vpop.permute.xlu0 %26
    %30 = vset.pattern.permute.xlu0 0
    %31 = vperm.xlu0 %30, %v21
    %v32 = vpop.permute.xlu0 %31
    %35 = vset.pattern.permute.xlu0 0
    %36 = vperm.xlu0 %35, %v22
    %v37 = vpop.permute.xlu0 %36
    %40 = vset.pattern.permute.xlu0 0
    %41 = vperm.xlu0 %40, %v23
    %v42 = vpop.permute.xlu0 %41
    %v45 = vlaneseq
    %v46 = vshrl.u32 %v45, 7
    %v47 = vsub.s32 0, %v46
    %v48 = vrot.slane %v19, %v47
    %v50 = vmul.f32 %v27, %v48
    %v51 = vmul.f32 %v32, %v48
    %v52 = vmul.f32 %v37, %v48
    %v53 = vmul.f32 %v42, %v48
    %54 = vset.pattern.permute.xlu0 1
    %55 = vperm.xlu0 %54, %v20
    %v56 = vpop.permute.xlu0 %55
    %58 = vset.pattern.permute.xlu0 1
    %59 = vperm.xlu0 %58, %v21
    %v60 = vpop.permute.xlu0 %59
    %62 = vset.pattern.permute.xlu0 1
    %63 = vperm.xlu0 %62, %v22
    %v64 = vpop.permute.xlu0 %63
    %66 = vset.pattern.permute.xlu0 1
    %67 = vperm.xlu0 %66, %v23
    %v68 = vpop.permute.xlu0 %67
    %v70 = vadd.f32 %v50, %v56
    %v71 = vadd.f32 %v51, %v60
    %v72 = vadd.f32 %v52, %v64
    %v73 = vadd.f32 %v53, %v68
    %v74 = vmax.f32 %v70, 0.0
    %v75 = vmax.f32 %v71, 0.0
    %v76 = vmax.f32 %v72, 0.0
    %v77 = vmax.f32 %v73, 0.0
    %v78 = vld [vmem:[%s2] sm:$0xff]
    %v79 = vld [vmem:[%s2 + $0x8] sm:$0xff]
    %v80 = vld [vmem:[%s2 + $0x10] sm:$0xff]
    %v81 = vld [vmem:[%s2 + $0x18] sm:$0xff]
    %82 = vset.pattern.permute.xlu0 2
    %83 = vperm.xlu0 %82, %v20
    %v84 = vpop.permute.xlu0 %83
    %86 = vset.pattern.permute.xlu0 2
    %87 = vperm.xlu0 %86, %v21
    %v88 = vpop.permute.xlu0 %87
    %90 = vset.pattern.permute.xlu0 2
    %91 = vperm.xlu0 %90, %v22
    %v92 = vpop.permute.xlu0 %91
    %94 = vset.pattern.permute.xlu0 2
    %95 = vperm.xlu0 %94, %v23
    %v96 = vpop.permute.xlu0 %95
    %vm98 = vcmask 261120
    %v100 = vsel %vm98, %v78, 0
    %v103 = vsel %vm98, %v79, 0
    %v106 = vsel %vm98, %v80, 0
    %v109 = vsel %vm98, %v81, 0
    %111 = vmatprep.subr.mxu0 0.0
    %112 = vmatpush1.msra.mxu0 %v74
    %113 = vmatprep.subr.mxu0 0.0
    %114 = vmatpush1.msra.mxu0 %v75
    %115 = vmatprep.subr.mxu0 0.0
    %116 = vmatpush1.msra.mxu0 %v76
    %117 = vmatprep.subr.mxu0 0.0
    %118 = vmatpush1.msra.mxu0 %v77
    %119 = vmatprep.subr.mxu0 0.0
    %120 = vmatpush1.msra.mxu0 0.0
    %121 = vmatprep.subr.mxu0 0.0
    %122 = vmatpush1.msra.mxu0 0.0
    %123 = vmatprep.subr.mxu0 0.0
    %124 = vmatpush1.msra.mxu0 0.0
    %125 = vmatprep.subr.mxu0 0.0
    %126 = vmatpush1.msra.mxu0 0.0
    %127 = vmatprep.subr.mxu0 0.0
    %128 = vmatpush1.msra.mxu0 0.0
    %129 = vmatprep.subr.mxu0 0.0
    %130 = vmatpush1.msra.mxu0 0.0
    %131 = vmatprep.subr.mxu0 0.0
    %132 = vmatpush1.msra.mxu0 0.0
    %133 = vmatprep.subr.mxu0 0.0
    %134 = vmatpush1.msra.mxu0 0.0
    %135 = vmatprep.subr.mxu0 0.0
    %136 = vmatpush1.msra.mxu0 0.0
    %137 = vmatprep.subr.mxu0 0.0
    %138 = vmatpush1.msra.mxu0 0.0
    %139 = vmatprep.subr.mxu0 0.0
    %140 = vmatpush1.msra.mxu0 0.0
    %141 = vmatprep.subr.mxu0 0.0
    %142 = vmatpush1.msra.mxu0 0.0
    %143 = vmatprep.subr.mxu0 0.0
    %144 = vmatpush1.msra.mxu0 0.0
    %145 = vmatprep.subr.mxu0 0.0
    %146 = vmatpush1.msra.mxu0 0.0
    %147 = vmatprep.subr.mxu0 0.0
    %148 = vmatpush1.msra.mxu0 0.0
    %149 = vmatprep.subr.mxu0 0.0
    %150 = vmatpush1.msra.mxu0 0.0
    %151 = vmatprep.subr.mxu0 0.0
    %152 = vmatpush1.msra.mxu0 0.0
    %153 = vmatprep.subr.mxu0 0.0
    %154 = vmatpush1.msra.mxu0 0.0
    %155 = vmatprep.subr.mxu0 0.0
    %156 = vmatpush1.msra.mxu0 0.0
    %157 = vmatprep.subr.mxu0 0.0
    %158 = vmatpush1.msra.mxu0 0.0
    %159 = vmatprep.subr.mxu0 0.0
    %160 = vmatpush1.msra.mxu0 0.0
    %161 = vmatprep.subr.mxu0 0.0
    %162 = vmatpush1.msra.mxu0 0.0
    %163 = vmatprep.subr.mxu0 0.0
    %164 = vmatpush1.msra.mxu0 0.0
    %165 = vmatprep.subr.mxu0 0.0
    %166 = vmatpush1.msra.mxu0 0.0
    %167 = vmatprep.subr.mxu0 0.0
    %168 = vmatpush1.msra.mxu0 0.0
    %169 = vmatprep.subr.mxu0 0.0
    %170 = vmatpush1.msra.mxu0 0.0
    %171 = vmatprep.subr.mxu0 0.0
    %172 = vmatpush1.msra.mxu0 0.0
    %173 = vmatprep.subr.mxu0 0.0
    %174 = vmatpush1.msra.mxu0 0.0
    %175 = vmatprep.mubr.f32.mxu0 0.0
    %176 = vmatmul.mubr.f32.gmra.mrb[0].mxu0 %v100
    %v177 = vpop.f32.mrb[0].mxu0
    %v178 = vadd.f32 %v84, %v177
    %v179 = vpop.f32.mrb[0].mxu0
    %180 = vmatprep.mubr.f32.mxu0 0.0
    %181 = vmatmul.mubr.f32.gmra.mrb[0].mxu0 %v103
    %v182 = vpop.f32.mrb[0].mxu0
    %v183 = vadd.f32 %v88, %v182
    %v184 = vpop.f32.mrb[0].mxu0
    %185 = vmatprep.mubr.f32.mxu0 0.0
    %186 = vmatmul.mubr.f32.gmra.mrb[0].mxu0 %v106
    %v187 = vpop.f32.mrb[0].mxu0
    %v188 = vadd.f32 %v92, %v187
    %v189 = vpop.f32.mrb[0].mxu0
    %190 = vmatprep.mubr.f32.mxu0 0.0
    %191 = vmatmul.mubr.f32.gmra.mrb[0].mxu0 %v109
    %v192 = vpop.f32.mrb[0].mxu0
    %v193 = vadd.f32 %v96, %v192
    %v194 = vpop.f32.mrb[0].mxu0
    %195 = vdwg.mxu0
    %v196 = vmax.f32 %v178, 0.0
    %v197 = vmax.f32 %v183, 0.0
    %v198 = vmax.f32 %v188, 0.0
    %v199 = vmax.f32 %v193, 0.0
    %200 = vset.pattern.permute.xlu0 3
    %201 = vperm.xlu0 %200, %v20
    %v202 = vpop.permute.xlu0 %201
    %204 = vset.pattern.permute.xlu0 3
    %205 = vperm.xlu0 %204, %v21
    %v206 = vpop.permute.xlu0 %205
    %208 = vset.pattern.permute.xlu0 3
    %209 = vperm.xlu0 %208, %v22
    %v210 = vpop.permute.xlu0 %209
    %212 = vset.pattern.permute.xlu0 3
    %213 = vperm.xlu0 %212, %v23
    %v214 = vpop.permute.xlu0 %213
    %v216 = vmul.f32 %v196, %v202
    %v217 = vmul.f32 %v197, %v206
    %v218 = vmul.f32 %v198, %v210
    %v219 = vmul.f32 %v199, %v214
    %v220 = vadd.f32 %v216, %v217
    %v221 = vadd.f32 %v220, %v218
    %v222 = vadd.f32 %v221, %v219
    %v223 = vrot.slane %v222, 4
    %v224 = vadd.f32 %v222, %v223
    %v225 = vrot.slane %v224, 2
    %v226 = vadd.f32 %v224, %v225
    %v227 = vrot.slane %v226, 1
    %v228 = vadd.f32 %v226, %v227
    %s229 = sld [smem:[#allocation2]]
    %v230 = vstv %s229
    %v231 = vadd.f32 %v228, %v230
    %232 = vst [vmem:[#allocation3] sm:$0x1] %v231
    // Predicated region
    $region18: #{tpu_custom_call.1} parent=1 // pred_check
      _
    $region19: #{tpu_custom_call.1} parent=1 // pred_check_branch
      %234 = sbr.rel (0) target = $region21
    $region20: #{tpu_custom_call.1} parent=1 // pred_region
      %s236 = ssub.s32 16, 16
      %237 = vsyncadd [#allocation4], %s236
      %s239 = sshll.u32 [#allocation3], 4
      %s240 = int_to_ptr.vmem [resolvable:$true] %s239
      %242 = dma.vmem_to_hbm [thread:$0]  %s240, 16, %s4, [#allocation4]
    $region21: #{tpu_custom_call.1} parent=1 // pred_fallthru
      _
    // Predicated region
    $region22: #{tpu_custom_call.1} parent=1 // pred_check
      _
    $region23: #{tpu_custom_call.1} parent=1 // pred_check_branch
      %244 = sbr.rel (0) target = $region25
    $region24: #{tpu_custom_call.1} parent=1 // pred_region
      %245 = dma.done [#allocation4], 16
    $region25: #{tpu_custom_call.1} parent=1 // pred_fallthru
      _
    %246 = vsyncpa [#allocation4], 1

</llo_original>
